<compile_context>
chip_gen: v6e
topology: v6e:2x2x1
jax: 0.10.0
libtpu: 0.0.40
codegen_flags: <defaults>
</compile_context>

<pallas_src>
import jax
import jax.numpy as jnp
from jax import lax
from jax.experimental import pallas as pl
from jax.experimental.pallas import tpu as pltpu


def _wsf_kernel(scal_ref, sim_ref, com_ref, wfc_ref, ypred_ref, y2_ref):
    # scal_ref : SMEM (3,) f32 -> [fc2_bias, w0, w1]
    # sim_ref  : (1, TB)   sim encoder output (batch on lanes)
    # com_ref  : (TB, D)   com encoder output, natural layout (batch on sublanes)
    # wfc_ref  : (8, D)    fc2 weight replicated across 8 sublanes (f32)
    # ypred_ref, y2_ref : (1, TB)   lane-dense outputs
    com = com_ref[...].astype(jnp.float32)       # (TB, D)
    wfc = wfc_ref[...]                           # (8, D), already f32
    y1 = sim_ref[...].astype(jnp.float32)        # (1, TB)

    bias = scal_ref[0]
    w0 = scal_ref[1]
    w1 = scal_ref[2]

    # fc2 as a transposed-RHS contraction on the MXU:
    #   (8, D) x (TB, D) -> (8, TB), contracting on D (rows of result identical).
    y2_full = lax.dot_general(
        wfc, com, (((1,), (1,)), ((), ())), preferred_element_type=jnp.float32)
    y2 = y2_full[0:1, :] + bias                  # (1, TB), lane-dense

    # Weighted sum as a scalar FMA on the VPU (no concat, no (TB,2)@(2,1) dot).
    ypred = y1 * w0 + y2 * w1

    y2_ref[...] = y2.astype(y2_ref.dtype)
    ypred_ref[...] = ypred.astype(ypred_ref.dtype)


def wsf_forward(sim_encoder_out, com_encoder_out, fc2_w, fc2_b, w, *, tb=None,
                out_dtype=jnp.float32):
    """WSF forward.

    sim_encoder_out: (B, 1), com_encoder_out: (B, D)  -- any float dtype.
    fc2_w: (1, D) (torch nn.Linear layout), fc2_b: (1,), w: (2, 1).
    Returns (y_pred, y_pred_1, y_pred_2), each (B, 1).
    """
    B = sim_encoder_out.shape[0]
    D = com_encoder_out.shape[-1]

    # Pick a lane-dense batch tile (multiple of 128) that divides B.
    if tb is None:
        for cand in (1024, 512, 256, 128):
            if B % cand == 0:
                tb = cand
                break
        else:
            tb = B          # tiny-batch fallback: one full-array block
    assert B % tb == 0, "tb must divide B"
    assert tb == B or tb % 128 == 0, "tb must be a multiple of 128 or equal B"

    # Layout plumbing (all tiny / free): batch on lanes for sim & outputs.
    sim_t = sim_encoder_out.reshape(1, B)                        # (1, B) free reshape
    wfc8 = jnp.tile(fc2_w.reshape(1, D).astype(jnp.float32),
                    (8, 1))                                      # (8, D), few KB
    scalars = jnp.concatenate(
        [fc2_b.reshape(1), w.reshape(2)]).astype(jnp.float32)    # (3,) -> SMEM

    grid = (B // tb,)
    in_item = jnp.dtype(com_encoder_out.dtype).itemsize
    cost = pl.CostEstimate(
        flops=2 * B * D + 4 * B,
        transcendentals=0,
        bytes_accessed=(B * D * in_item
                        + B * jnp.dtype(sim_encoder_out.dtype).itemsize
                        + 8 * D * 4
                        + 2 * B * jnp.dtype(out_dtype).itemsize),
    )

    y_pred_t, y2_t = pl.pallas_call(
        _wsf_kernel,
        out_shape=(
            jax.ShapeDtypeStruct((1, B), out_dtype),   # y_pred
            jax.ShapeDtypeStruct((1, B), out_dtype),   # y_pred_2
        ),
        grid_spec=pltpu.PrefetchScalarGridSpec(
            num_scalar_prefetch=0,
            grid=grid,
            in_specs=[
                pl.BlockSpec(memory_space=pltpu.MemorySpace.SMEM),  # [bias, w0, w1]
                pl.BlockSpec((1, tb), lambda i: (0, i)),            # sim_t
                pl.BlockSpec((tb, D), lambda i: (i, 0)),            # com (natural)
                pl.BlockSpec((8, D), lambda i: (0, 0)),             # fc2 weight x8
            ],
            out_specs=[
                pl.BlockSpec((1, tb), lambda i: (0, i)),            # y_pred
                pl.BlockSpec((1, tb), lambda i: (0, i)),            # y_pred_2
            ],
        ),
        compiler_params=pltpu.CompilerParams(
            dimension_semantics=("parallel",)),
        cost_estimate=cost,
    )(scalars, sim_t, com_encoder_out, wfc8)

    y_pred = y_pred_t.reshape(B, 1)
    y_pred_2 = y2_t.reshape(B, 1)
    # y_pred_1 is literally the input; no kernel output / extra HBM writeback.
    y_pred_1 = sim_encoder_out
    return y_pred, y_pred_1, y_pred_2


if __name__ == "__main__":
    key = jax.random.PRNGKey(0)
    k_sim, k_com, k_w, k_b = jax.random.split(key, 4)

    B = 256                # batch (tb=128 -> 2 parallel grid steps)
    D = 32                 # com_encoder_dim

    sim_encoder_out = jax.random.normal(k_sim, (B, 1), dtype=jnp.float32)
    com_encoder_out = jax.random.normal(k_com, (B, D), dtype=jnp.float32)

    # Deterministic synthetic parameters matching the torch module shapes.
    fc2_w = jax.random.normal(k_w, (1, D), dtype=jnp.float32) * 0.1   # nn.Linear(D,1).weight
    fc2_b = jax.random.normal(k_b, (1,), dtype=jnp.float32) * 0.1     # nn.Linear(D,1).bias
    w_param = jnp.full((2, 1), 0.5, dtype=jnp.float32)                # self.w

    y_pred, y_pred_1, y_pred_2 = wsf_forward(
        sim_encoder_out, com_encoder_out, fc2_w, fc2_b, w_param, tb=128)
    jax.block_until_ready((y_pred, y_pred_1, y_pred_2))

    # Pure-JAX reference check.
    y2_ref = com_encoder_out @ fc2_w.T + fc2_b
    y_ref = jnp.concatenate([sim_encoder_out, y2_ref], axis=-1) @ w_param
    assert jnp.allclose(y_pred_1, sim_encoder_out, atol=1e-5)
    assert jnp.allclose(y_pred_2, y2_ref, atol=1e-5)
    assert jnp.allclose(y_pred, y_ref, atol=1e-5)

    print("KERNEL_OK")
</pallas_src>

<mosaic_0001>
module attributes {stable_mosaic.version = 11 : i64} {
  func.func @_wsf_kernel(%arg0: i32, %arg1: memref<3xf32, #tpu.memory_space<smem>>, %arg2: memref<1x128xf32, #tpu.memory_space<vmem>>, %arg3: memref<128x32xf32, #tpu.memory_space<vmem>>, %arg4: memref<8x32xf32, #tpu.memory_space<vmem>>, %arg5: memref<1x128xf32, #tpu.memory_space<vmem>>, %arg6: memref<1x128xf32, #tpu.memory_space<vmem>>) attributes {dimension_semantics = [#tpu.dimension_semantics<parallel>], iteration_bounds = array<i64: 2>, scalar_prefetch = 0 : i64, scratch_operands = 0 : i64, tpu.core_type = #tpu.core_type<tc>, window_params = [{transform_indices = @transform_0, window_bounds = array<i64: 3>}, {transform_indices = @transform_1, window_bounds = array<i64: 1, 128>}, {transform_indices = @transform_2, window_bounds = array<i64: 128, 32>}, {pipeline_mode = #tpu.pipeline_mode<synchronous>, transform_indices = @transform_3, window_bounds = array<i64: 8, 32>}, {transform_indices = @transform_4, window_bounds = array<i64: 1, 128>}, {transform_indices = @transform_5, window_bounds = array<i64: 1, 128>}]} {
    %c0 = arith.constant 0 : index
    %c0_0 = arith.constant 0 : index
    %0 = vector.load %arg3[%c0, %c0_0] : memref<128x32xf32, #tpu.memory_space<vmem>>, vector<128x32xf32>
    %c0_1 = arith.constant 0 : index
    %c0_2 = arith.constant 0 : index
    %1 = vector.load %arg4[%c0_1, %c0_2] : memref<8x32xf32, #tpu.memory_space<vmem>>, vector<8x32xf32>
    %c0_3 = arith.constant 0 : index
    %c0_4 = arith.constant 0 : index
    %2 = vector.load %arg2[%c0_3, %c0_4] : memref<1x128xf32, #tpu.memory_space<vmem>>, vector<1x128xf32>
    %c0_5 = arith.constant 0 : index
    %3 = memref.load %arg1[%c0_5] : memref<3xf32, #tpu.memory_space<smem>>
    %c1 = arith.constant 1 : index
    %4 = memref.load %arg1[%c1] : memref<3xf32, #tpu.memory_space<smem>>
    %c2 = arith.constant 2 : index
    %5 = memref.load %arg1[%c2] : memref<3xf32, #tpu.memory_space<smem>>
    %cst = arith.constant dense<0.000000e+00> : vector<8x128xf32>
    %6 = tpu.matmul %1, %0, %cst {dimension_numbers = #tpu.dot_dimension_numbers<[1], [1], [0], [0], [0, 0, 1, 0], [], []>} : vector<8x32xf32>, vector<128x32xf32>, vector<8x128xf32> -> vector<8x128xf32>
    %7 = vector.extract_strided_slice %6 {offsets = [0, 0], sizes = [1, 128], strides = [1, 1]} : vector<8x128xf32> to vector<1x128xf32>
    %8 = vector.broadcast %3 : f32 to vector<1x128xf32>
    %9 = arith.addf %7, %8 : vector<1x128xf32>
    %10 = vector.broadcast %4 : f32 to vector<1x128xf32>
    %11 = arith.mulf %2, %10 : vector<1x128xf32>
    %12 = vector.broadcast %5 : f32 to vector<1x128xf32>
    %13 = arith.mulf %9, %12 : vector<1x128xf32>
    %14 = arith.addf %11, %13 : vector<1x128xf32>
    %c0_6 = arith.constant 0 : index
    %c0_7 = arith.constant 0 : index
    %15 = vector.load %arg6[%c0_6, %c0_7] : memref<1x128xf32, #tpu.memory_space<vmem>>, vector<1x128xf32>
    tpu.vector_store %arg6[%c0_6, %c0_7], %9 {strides = array<i32>} : memref<1x128xf32, #tpu.memory_space<vmem>>, vector<1x128xf32>,
    %c0_8 = arith.constant 0 : index
    %c0_9 = arith.constant 0 : index
    %16 = vector.load %arg5[%c0_8, %c0_9] : memref<1x128xf32, #tpu.memory_space<vmem>>, vector<1x128xf32>
    tpu.vector_store %arg5[%c0_8, %c0_9], %14 {strides = array<i32>} : memref<1x128xf32, #tpu.memory_space<vmem>>, vector<1x128xf32>,
    return
  }
  func.func @transform_0(%arg0: i32) -> i32 {
    %c0_i32 = arith.constant 0 : i32
    %c0_i32_0 = arith.constant 0 : i32
    return %c0_i32 : i32
  }
  func.func @transform_1(%arg0: i32) -> (i32, i32) {
    %c0_i32 = arith.constant 0 : i32
    %c0_i32_0 = arith.constant 0 : i32
    return %c0_i32, %arg0 : i32, i32
  }
  func.func @transform_2(%arg0: i32) -> (i32, i32) {
    %c0_i32 = arith.constant 0 : i32
    %c0_i32_0 = arith.constant 0 : i32
    return %arg0, %c0_i32 : i32, i32
  }
  func.func @transform_3(%arg0: i32) -> (i32, i32) {
    %c0_i32 = arith.constant 0 : i32
    %c0_i32_0 = arith.constant 0 : i32
    %c0_i32_1 = arith.constant 0 : i32
    return %c0_i32, %c0_i32_0 : i32, i32
  }
  func.func @transform_4(%arg0: i32) -> (i32, i32) {
    %c0_i32 = arith.constant 0 : i32
    %c0_i32_0 = arith.constant 0 : i32
    return %c0_i32, %arg0 : i32, i32
  }
  func.func @transform_5(%arg0: i32) -> (i32, i32) {
    %c0_i32 = arith.constant 0 : i32
    %c0_i32_0 = arith.constant 0 : i32
    return %c0_i32, %arg0 : i32, i32
  }
}

</mosaic_0001>

<llo_original>
// kernel: tpu_custom_call.1
$region0: #{tpu_custom_call.1}
  #allocation0 [shape = 'u32[]', space=smem, size = 0x4, offset = 0x4, fixed_abs, tag = 'smem constant byte address 0x4 - core index']
  #allocation1 [shape = 'u32[144,128]{1,0:T(1,128)}', space=vmem, size = 0x12000, scoped, tag = 'internal scratch']
  %s0 = inlined_call_operand.vmem [shape: f32[3], index: 0, kind: input, shape index: {}]
  %s1 = inlined_call_operand.vmem [shape: f32[1,256], index: 1, kind: input, shape index: {}]
  %s2 = inlined_call_operand.vmem [shape: f32[256,32], index: 2, kind: input, shape index: {}]
  %s3 = inlined_call_operand.vmem [shape: f32[8,32], index: 3, kind: input, shape index: {}]
  %s4 = inlined_call_operand.hbm [shape: f32[1,256], index: 4, kind: output, shape index: {0}]
  %s5 = inlined_call_operand.hbm [shape: f32[1,256], index: 5, kind: output, shape index: {1}]
  %6 = xla_tuple %s4, %s5
  %s7 = sld [smem:[#allocation0]]
  $region61: #{tpu_custom_call.1} parent=0
    _
  %s9 = ssub.s32 1, %s7
  %s10 = scalar_select 0, %s9, %s7
  $region1: #{tpu_custom_call.1} parent=0
    #allocation2 [shape = 'u8[512]{0}', space=smem, size = 0x200, scoped, tag = 'input window, operand 0, single buffered']
    #allocation3 [shape = 's32[2]{0}', space=sflag, size = 0x8, scoped, tag = 'scoped memory for tpu_custom_call.1']
    #allocation4 [shape = 's32[2]{0}', space=sflag, size = 0x8, scoped, tag = 'scoped memory for tpu_custom_call.1']
    #allocation5 [shape = 'u8[1024]{0}', space=vmem, size = 0x400, scoped, tag = 'output window, operand 0']
    #allocation6 [shape = 'u8[1024]{0}', space=vmem, size = 0x400, scoped, tag = 'output window, operand 1']
    #allocation7 [shape = 's32[2]{0}', space=sflag, size = 0x8, scoped, tag = 'scoped memory for tpu_custom_call.1']
    %11 = vsyncpa [#allocation4], 0
    %12 = vsyncpa [#allocation3], 0
    %s13 = scalar_lea.sflag [#allocation3], 1
    %14 = vsyncpa %s13, 0
    %15 = vsyncpa [#allocation7], 0
    %s16 = scalar_lea.sflag [#allocation7], 1
    %17 = vsyncpa %s16, 0
    loop: start=0, step=1, limit=4
    $region2: #{tpu_custom_call.1} parent=1 // loop_pre_header
      _
    $region3: #{tpu_custom_call.1} parent=1 // loop_header
      %s19 = sphi 0, %s23
      %p20 = scmp.ge.s32.totalorder %s19, 4
      %s27 = sphi 0, %s27
      %s29 = sphi 0, %s27
      %s30 = sphi 0, %s29
      %s44 = sphi 0, %s30
      %s50 = sphi 0, %s52
      %s53 = sphi 0, %s50
      %s54 = sphi 0, %s53
      %s70 = sphi 0, %s54
      %s76 = sphi 0, %s78
      %s79 = sphi 0, %s76
      %s80 = sphi 0, %s79
      %s96 = sphi 0, %s80
      %s100 = sphi 0, %s100
      %s102 = sphi 0, %s100
      %s103 = sphi 0, %s102
      %s117 = sphi 0, %s103
      %s123 = sphi 0, %s125
      %s126 = sphi 0, %s123
      %s127 = sphi 0, %s126
      %s143 = sphi 0, %s127
      %s149 = sphi 0, %s151
      %s152 = sphi 0, %s149
      %s153 = sphi 0, %s152
      %s169 = sphi 0, %s153
    $region4: #{tpu_custom_call.1} parent=1 // loop_header_branch
      %22 = sbr.rel (%p20) target = $region8
    $region5: #{tpu_custom_call.1} parent=1 // loop_body
      %s24 = ssub.s32 %s19, 1
      %s25 = ssub.s32 %s19, 2
      %s26 = sadd.s32 %s19, 1
      %s28 = sadd.s32 %s27, 1
      %p31 = scmp.eq.s32.totalorder %s19, 1
      %p32 = scmp.ne.s32.totalorder %s27, %s29
      %p33 = scmp.eq.s32.totalorder %s19, 0
      %p34 = por %p32, %p33
      %p35 = scmp.ne.s32.totalorder %s27, %s29
      %p36 = scmp.eq.s32.totalorder %s24, 1
      %p37 = por %p35, %p36
      %p38 = scmp.ne.s32.totalorder %s29, %s30
      %p39 = scmp.eq.s32.totalorder %s24, 0
      %p40 = por %p38, %p39
      %p41 = scmp.ne.s32.totalorder %s29, %s30
      %p42 = scmp.eq.s32.totalorder %s25, 1
      %p43 = por %p41, %p42
      %p45 = scmp.ne.s32.totalorder %s30, %s44
      %p46 = scmp.eq.s32.totalorder %s25, 0
      %p47 = por %p45, %p46
      %s48 = ssub.s32 %s19, %s26
      %p49 = scmp.eq.s32.totalorder %s48, 0
      %s51 = sadd.s32 %s50, 1
      %s52 = scalar_select %p49, %s50, %s51
      %p55 = pneg %p49
      %p56 = scmp.eq.s32.totalorder %s19, 1
      %p57 = por %p55, %p56
      %p58 = scmp.ne.s32.totalorder %s50, %s53
      %p59 = scmp.eq.s32.totalorder %s19, 0
      %p60 = por %p58, %p59
      %p61 = scmp.ne.s32.totalorder %s50, %s53
      %p62 = scmp.eq.s32.totalorder %s24, 1
      %p63 = por %p61, %p62
      %p64 = scmp.ne.s32.totalorder %s53, %s54
      %p65 = scmp.eq.s32.totalorder %s24, 0
      %p66 = por %p64, %p65
      %p67 = scmp.ne.s32.totalorder %s53, %s54
      %p68 = scmp.eq.s32.totalorder %s25, 1
      %p69 = por %p67, %p68
      %p71 = scmp.ne.s32.totalorder %s54, %s70
      %p72 = scmp.eq.s32.totalorder %s25, 0
      %p73 = por %p71, %p72
      %s74 = ssub.s32 %s19, %s26
      %p75 = scmp.eq.s32.totalorder %s74, 0
      %s77 = sadd.s32 %s76, 1
      %s78 = scalar_select %p75, %s76, %s77
      %p81 = pneg %p75
      %p82 = scmp.eq.s32.totalorder %s19, 1
      %p83 = por %p81, %p82
      %p84 = scmp.ne.s32.totalorder %s76, %s79
      %p85 = scmp.eq.s32.totalorder %s19, 0
      %p86 = por %p84, %p85
      %p87 = scmp.ne.s32.totalorder %s76, %s79
      %p88 = scmp.eq.s32.totalorder %s24, 1
      %p89 = por %p87, %p88
      %p90 = scmp.ne.s32.totalorder %s79, %s80
      %p91 = scmp.eq.s32.totalorder %s24, 0
      %p92 = por %p90, %p91
      %p93 = scmp.ne.s32.totalorder %s79, %s80
      %p94 = scmp.eq.s32.totalorder %s25, 1
      %p95 = por %p93, %p94
      %p97 = scmp.ne.s32.totalorder %s80, %s96
      %p98 = scmp.eq.s32.totalorder %s25, 0
      %p99 = por %p97, %p98
      %s101 = sadd.s32 %s100, 1
      %p104 = scmp.eq.s32.totalorder %s19, 1
      %p105 = scmp.ne.s32.totalorder %s100, %s102
      %p106 = scmp.eq.s32.totalorder %s19, 0
      %p107 = por %p105, %p106
      %p108 = scmp.ne.s32.totalorder %s100, %s102
      %p109 = scmp.eq.s32.totalorder %s24, 1
      %p110 = por %p108, %p109
      %p111 = scmp.ne.s32.totalorder %s102, %s103
      %p112 = scmp.eq.s32.totalorder %s24, 0
      %p113 = por %p111, %p112
      %p114 = scmp.ne.s32.totalorder %s102, %s103
      %p115 = scmp.eq.s32.totalorder %s25, 1
      %p116 = por %p114, %p115
      %p118 = scmp.ne.s32.totalorder %s103, %s117
      %p119 = scmp.eq.s32.totalorder %s25, 0
      %p120 = por %p118, %p119
      %s121 = ssub.s32 %s19, %s26
      %p122 = scmp.eq.s32.totalorder %s121, 0
      %s124 = sadd.s32 %s123, 1
      %s125 = scalar_select %p122, %s123, %s124
      %p128 = pneg %p122
      %p129 = scmp.eq.s32.totalorder %s19, 1
      %p130 = por %p128, %p129
      %p131 = scmp.ne.s32.totalorder %s123, %s126
      %p132 = scmp.eq.s32.totalorder %s19, 0
      %p133 = por %p131, %p132
      %p134 = scmp.ne.s32.totalorder %s123, %s126
      %p135 = scmp.eq.s32.totalorder %s24, 1
      %p136 = por %p134, %p135
      %p137 = scmp.ne.s32.totalorder %s126, %s127
      %p138 = scmp.eq.s32.totalorder %s24, 0
      %p139 = por %p137, %p138
      %p140 = scmp.ne.s32.totalorder %s126, %s127
      %p141 = scmp.eq.s32.totalorder %s25, 1
      %p142 = por %p140, %p141
      %p144 = scmp.ne.s32.totalorder %s127, %s143
      %p145 = scmp.eq.s32.totalorder %s25, 0
      %p146 = por %p144, %p145
      %s147 = ssub.s32 %s19, %s26
      %p148 = scmp.eq.s32.totalorder %s147, 0
      %s150 = sadd.s32 %s149, 1
      %s151 = scalar_select %p148, %s149, %s150
      %p154 = pneg %p148
      %p155 = scmp.eq.s32.totalorder %s19, 1
      %p156 = por %p154, %p155
      %p157 = scmp.ne.s32.totalorder %s149, %s152
      %p158 = scmp.eq.s32.totalorder %s19, 0
      %p159 = por %p157, %p158
      %p160 = scmp.ne.s32.totalorder %s149, %s152
      %p161 = scmp.eq.s32.totalorder %s24, 1
      %p162 = por %p160, %p161
      %p163 = scmp.ne.s32.totalorder %s152, %s153
      %p164 = scmp.eq.s32.totalorder %s24, 0
      %p165 = por %p163, %p164
      %p166 = scmp.ne.s32.totalorder %s152, %s153
      %p167 = scmp.eq.s32.totalorder %s25, 1
      %p168 = por %p166, %p167
      %p170 = scmp.ne.s32.totalorder %s153, %s169
      %p171 = scmp.eq.s32.totalorder %s25, 0
      %p172 = por %p170, %p171
      %p173 = scmp.le.s32.totalorder 1, %s19
      %p174 = scmp.lt.s32.totalorder %s19, 3
      %p175 = pnand %p173, %p174
      %p176 = pneg %p175
      // Predicated region
      $region9: #{tpu_custom_call.1} parent=5 // pred_check
        _
      $region10: #{tpu_custom_call.1} parent=5 // pred_check_branch
        %178 = sbr.rel (%p175) target = $region12
      $region11: #{tpu_custom_call.1} parent=5 // pred_region
        %s179 = ssub.s32 %s19, 1
        // Predicated region
        $region13: #{tpu_custom_call.1} parent=11 // pred_check
          %p180 = pneg %p40
        $region14: #{tpu_custom_call.1} parent=11 // pred_check_branch
          %182 = sbr.rel (%p180) target = $region16
        $region15: #{tpu_custom_call.1} parent=11 // pred_region
          %s184 = ssub.s32 16, 16
          %185 = vsyncadd [#allocation4], %s184
          %s187 = sshll.u32 %s0, 4
          %s188 = int_to_ptr.vmem [resolvable:$true] %s187
          %190 = dma.vmem_to_smem %s188, 16, [#allocation2], [#allocation4]
        $region16: #{tpu_custom_call.1} parent=11 // pred_fallthru
          _
        // Predicated region
        $region17: #{tpu_custom_call.1} parent=11 // pred_check
          %p191 = pneg %p113
        $region18: #{tpu_custom_call.1} parent=11 // pred_check_branch
          %193 = sbr.rel (%p191) target = $region20
        $region19: #{tpu_custom_call.1} parent=11 // pred_region
          _
        $region20: #{tpu_custom_call.1} parent=11 // pred_fallthru
          _
      $region12: #{tpu_custom_call.1} parent=5 // pred_fallthru
        _
      %p194 = scmp.lt.s32.totalorder %s19, 2
      // Predicated region
      $region21: #{tpu_custom_call.1} parent=5 // pred_check
        %p195 = pneg %p194
      $region22: #{tpu_custom_call.1} parent=5 // pred_check_branch
        %197 = sbr.rel (%p195) target = $region24
      $region23: #{tpu_custom_call.1} parent=5 // pred_region
        // Predicated region
        $region25: #{tpu_custom_call.1} parent=23 // pred_check
          %p198 = pneg %p60
        $region26: #{tpu_custom_call.1} parent=23 // pred_check_branch
          %200 = sbr.rel (%p198) target = $region28
        $region27: #{tpu_custom_call.1} parent=23 // pred_region
          %p201 = scmp.lt.s32.totalorder %s19, 1
          %s202 = scalar_select %p201, %s19, 1
          %s203 = scalar_lea.vmem %s1, %s202
        $region28: #{tpu_custom_call.1} parent=23 // pred_fallthru
          _
        // Predicated region
        $region29: #{tpu_custom_call.1} parent=23 // pred_check
          %p204 = pneg %p86
        $region30: #{tpu_custom_call.1} parent=23 // pred_check_branch
          %206 = sbr.rel (%p204) target = $region32
        $region31: #{tpu_custom_call.1} parent=23 // pred_region
          %s207 = smul.u32 16, %s19
          %p208 = scmp.lt.s32.totalorder %s207, 31
          %s209 = scalar_select %p208, %s207, 31
          %s210 = smul.addr %s209, 8
          %s211 = scalar_lea.vmem %s2, %s210
          %s212 = smul.u32 16, %s19
        $region32: #{tpu_custom_call.1} parent=23 // pred_fallthru
          _
      $region24: #{tpu_custom_call.1} parent=5 // pred_fallthru
        _
      %p213 = scmp.le.s32.totalorder 1, %s19
      %p214 = scmp.lt.s32.totalorder %s19, 3
      %p215 = pnand %p213, %p214
      %p216 = pneg %p215
      // Predicated region
      $region33: #{tpu_custom_call.1} parent=5 // pred_check
        _
      $region34: #{tpu_custom_call.1} parent=5 // pred_check_branch
        %218 = sbr.rel (%p215) target = $region36
      $region35: #{tpu_custom_call.1} parent=5 // pred_region
        %s219 = ssub.s32 %s19, 1
        // Predicated region
        $region37: #{tpu_custom_call.1} parent=35 // pred_check
          %p220 = pneg %p40
        $region38: #{tpu_custom_call.1} parent=35 // pred_check_branch
          %222 = sbr.rel (%p220) target = $region40
        $region39: #{tpu_custom_call.1} parent=35 // pred_region
          %223 = dma.done [#allocation4], 16
        $region40: #{tpu_custom_call.1} parent=35 // pred_fallthru
          _
        %224 = sfence
        %p225 = pneg %p40
        %p226 = pneg %p37
        %p227 = scmp.lt.s32.totalorder %s24, 1
        %s228 = scalar_select %p227, %s24, 1
        %s229 = scalar_lea.vmem %s1, %s228
        %p230 = pneg %p66
        %p231 = pneg %p63
        %s232 = smul.u32 16, %s24
        %p233 = scmp.lt.s32.totalorder %s232, 31
        %s234 = scalar_select %p233, %s232, 31
        %s235 = smul.addr %s234, 8
        %s236 = scalar_lea.vmem %s2, %s235
        %p237 = pneg %p92
        %p238 = pneg %p89
        %p239 = pneg %p113
        %p240 = pneg %p110
        %p241 = pneg %p139
        %p242 = pneg %p136
        %s243 = sand.u32 %s126, 1
        %s244 = scalar_lea.sflag [#allocation3], %s243
        %s245 = sand.u32 %s126, 1
        %s246 = scalar_lea.vmem [#allocation5], %s245
        %p247 = pneg %p165
        %p248 = pneg %p162
        %s249 = sand.u32 %s152, 1
        %s250 = scalar_lea.sflag [#allocation7], %s249
        %s251 = sand.u32 %s152, 1
        %s252 = scalar_lea.vmem [#allocation6], %s251
        %p253 = scmp.lt.s32.totalorder %s24, 1
        %s254 = scalar_select %p253, %s24, 1
        %s255 = scalar_lea.vmem %s1, %s254
        %s256 = smul.u32 16, %s24
        %p257 = scmp.lt.s32.totalorder %s256, 31
        %s258 = scalar_select %p257, %s256, 31
        %s259 = smul.addr %s258, 8
        %s260 = scalar_lea.vmem %s2, %s259
        %s261 = smul.u32 16, %s24
        %v262 = vld [vmem:[%s260] sm:$0xff]
        %v263 = vld [vmem:[%s260 + $0x8] sm:$0xff]
        %v264 = vld [vmem:[%s260 + $0x10] sm:$0xff]
        %v265 = vld [vmem:[%s260 + $0x18] sm:$0xff]
        %v266 = vld [vmem:[%s260 + $0x20] sm:$0xff]
        %v267 = vld [vmem:[%s260 + $0x28] sm:$0xff]
        %v268 = vld [vmem:[%s260 + $0x30] sm:$0xff]
        %v269 = vld [vmem:[%s260 + $0x38] sm:$0xff]
        %v270 = vld [vmem:[%s260 + $0x40] sm:$0xff]
        %v271 = vld [vmem:[%s260 + $0x48] sm:$0xff]
        %v272 = vld [vmem:[%s260 + $0x50] sm:$0xff]
        %v273 = vld [vmem:[%s260 + $0x58] sm:$0xff]
        %v274 = vld [vmem:[%s260 + $0x60] sm:$0xff]
        %v275 = vld [vmem:[%s260 + $0x68] sm:$0xff]
        %v276 = vld [vmem:[%s260 + $0x70] sm:$0xff]
        %v277 = vld [vmem:[%s260 + $0x78] sm:$0xff]
        %v278 = vld [vmem:[%s3] sm:$0xff]
        %v279 = vld [vmem:[%s255] sm:$0x1]
        %s280 = sld [smem:[#allocation2]]
        %s281 = sld [smem:[#allocation2 + $0x1]]
        %s282 = sld [smem:[#allocation2 + $0x2]]
        %vm283 = vcmask 261120
        %v285 = vsel %vm283, %v278, 0
        %v288 = vsel %vm283, %v262, 0
        %v291 = vsel %vm283, %v263, 0
        %v294 = vsel %vm283, %v264, 0
        %v297 = vsel %vm283, %v265, 0
        %v300 = vsel %vm283, %v266, 0
        %v303 = vsel %vm283, %v267, 0
        %v306 = vsel %vm283, %v268, 0
        %v309 = vsel %vm283, %v269, 0
        %v312 = vsel %vm283, %v270, 0
        %v315 = vsel %vm283, %v271, 0
        %v318 = vsel %vm283, %v272, 0
        %v321 = vsel %vm283, %v273, 0
        %v324 = vsel %vm283, %v274, 0
        %v327 = vsel %vm283, %v275, 0
        %v330 = vsel %vm283, %v276, 0
        %v333 = vsel %vm283, %v277, 0
        %335 = vmatprep.subr.mxu0 0.0
        %336 = vmatpush1.xpose.msra.mxu0 %v333
        %337 = vmatprep.subr.mxu0 0.0
        %338 = vmatpush1.xpose.msra.mxu0 %v330
        %339 = vmatprep.subr.mxu0 0.0
        %340 = vmatpush1.xpose.msra.mxu0 %v327
        %341 = vmatprep.subr.mxu0 0.0
        %342 = vmatpush1.xpose.msra.mxu0 %v324
        %343 = vmatprep.subr.mxu0 0.0
        %344 = vmatpush1.xpose.msra.mxu0 %v321
        %345 = vmatprep.subr.mxu0 0.0
        %346 = vmatpush1.xpose.msra.mxu0 %v318
        %347 = vmatprep.subr.mxu0 0.0
        %348 = vmatpush1.xpose.msra.mxu0 %v315
        %349 = vmatprep.subr.mxu0 0.0
        %350 = vmatpush1.xpose.msra.mxu0 %v312
        %351 = vmatprep.subr.mxu0 0.0
        %352 = vmatpush1.xpose.msra.mxu0 %v309
        %353 = vmatprep.subr.mxu0 0.0
        %354 = vmatpush1.xpose.msra.mxu0 %v306
        %355 = vmatprep.subr.mxu0 0.0
        %356 = vmatpush1.xpose.msra.mxu0 %v303
        %357 = vmatprep.subr.mxu0 0.0
        %358 = vmatpush1.xpose.msra.mxu0 %v300
        %359 = vmatprep.subr.mxu0 0.0
        %360 = vmatpush1.xpose.msra.mxu0 %v297
        %361 = vmatprep.subr.mxu0 0.0
        %362 = vmatpush1.xpose.msra.mxu0 %v294
        %363 = vmatprep.subr.mxu0 0.0
        %364 = vmatpush1.xpose.msra.mxu0 %v291
        %365 = vmatprep.subr.mxu0 0.0
        %366 = vmatpush1.xpose.msra.mxu0 %v288
        %367 = vmatprep.subr.mxu0 0.0
        %368 = vmatpush2.xpose.msra.mxu0 0.0
        %369 = vmatprep.subr.mxu0 0.0
        %370 = vmatpush2.xpose.msra.mxu0 0.0
        %371 = vmatprep.subr.mxu0 0.0
        %372 = vmatpush2.xpose.msra.mxu0 0.0
        %373 = vmatprep.subr.mxu0 0.0
        %374 = vmatpush2.xpose.msra.mxu0 0.0
        %375 = vmatprep.subr.mxu0 0.0
        %376 = vmatpush2.xpose.msra.mxu0 0.0
        %377 = vmatprep.subr.mxu0 0.0
        %378 = vmatpush2.xpose.msra.mxu0 0.0
        %379 = vmatprep.subr.mxu0 0.0
        %380 = vmatpush2.xpose.msra.mxu0 0.0
        %381 = vmatprep.subr.mxu0 0.0
        %382 = vmatpush2.xpose.msra.mxu0 0.0
        %383 = vmatprep.subr.mxu0 0.0
        %384 = vmatpush2.xpose.msra.mxu0 0.0
        %385 = vmatprep.subr.mxu0 0.0
        %386 = vmatpush2.xpose.msra.mxu0 0.0
        %387 = vmatprep.subr.mxu0 0.0
        %388 = vmatpush2.xpose.msra.mxu0 0.0
        %389 = vmatprep.subr.mxu0 0.0
        %390 = vmatpush2.xpose.msra.mxu0 0.0
        %391 = vmatprep.subr.mxu0 0.0
        %392 = vmatpush2.xpose.msra.mxu0 0.0
        %393 = vmatprep.subr.mxu0 0.0
        %394 = vmatpush2.xpose.msra.mxu0 0.0
        %395 = vmatprep.subr.mxu0 0.0
        %396 = vmatpush2.xpose.msra.mxu0 0.0
        %397 = vmatprep.subr.mxu0 0.0
        %398 = vmatpush2.xpose.msra.mxu0 0.0
        %399 = vmatprep.mubr.f32.mxu0 0.0
        %400 = vmatmul.mubr.f32.gmra.mxu0 %v285
        %v401 = vpop.f32.mrf.mxu0
        %v402 = vadd.f32 0.0, %v401
        %v403 = vpop.f32.mrf.mxu0
        %404 = vdwg.mxu0
        %v405 = vstv %s280
        %v406 = vadd.f32 %v402, %v405
        %v407 = vstv %s281
        %v408 = vmul.f32 %v279, %v407
        %v409 = vstv %s282
        %v410 = vmul.f32 %v406, %v409
        %v411 = vadd.f32 %v408, %v410
        %412 = vst [vmem:[%s252] sm:$0x1] %v406
        %413 = vst [vmem:[%s246] sm:$0x1] %v411
        %s414 = sand.u32 %s126, 1
        %s415 = scalar_lea.sflag [#allocation3], %s414
        %s416 = sand.u32 %s126, 1
        %s417 = scalar_lea.vmem [#allocation5], %s416
        %s418 = sand.u32 %s152, 1
        %s419 = scalar_lea.sflag [#allocation7], %s418
        %s420 = sand.u32 %s152, 1
        %s421 = scalar_lea.vmem [#allocation6], %s420
        // Predicated region
        $region41: #{tpu_custom_call.1} parent=35 // pred_check
          %p422 = pneg %p136
        $region42: #{tpu_custom_call.1} parent=35 // pred_check_branch
          %424 = sbr.rel (%p422) target = $region44
        $region43: #{tpu_custom_call.1} parent=35 // pred_region
          %s426 = ssub.s32 16, 16
          %427 = vsyncadd %s415, %s426
          %s428 = smul.addr %s24, 16
          %s429 = scalar_lea.hbm %s4, %s428
          %s431 = sshll.u32 %s417, 4
          %s432 = int_to_ptr.vmem [resolvable:$true] %s431
          %434 = dma.vmem_to_hbm [thread:$0]  %s432, 16, %s429, %s415
        $region44: #{tpu_custom_call.1} parent=35 // pred_fallthru
          _
        // Predicated region
        $region45: #{tpu_custom_call.1} parent=35 // pred_check
          %p435 = pneg %p162
        $region46: #{tpu_custom_call.1} parent=35 // pred_check_branch
          %437 = sbr.rel (%p435) target = $region48
        $region47: #{tpu_custom_call.1} parent=35 // pred_region
          %s439 = ssub.s32 16, 16
          %440 = vsyncadd %s419, %s439
          %s441 = smul.addr %s24, 16
          %s442 = scalar_lea.hbm %s5, %s441
          %s444 = sshll.u32 %s421, 4
          %s445 = int_to_ptr.vmem [resolvable:$true] %s444
          %447 = dma.vmem_to_hbm [thread:$0]  %s445, 16, %s442, %s419
        $region48: #{tpu_custom_call.1} parent=35 // pred_fallthru
          _
      $region36: #{tpu_custom_call.1} parent=5 // pred_fallthru
        _
      %p448 = scmp.le.s32.totalorder 2, %s19
      // Predicated region
      $region49: #{tpu_custom_call.1} parent=5 // pred_check
        %p449 = pneg %p448
      $region50: #{tpu_custom_call.1} parent=5 // pred_check_branch
        %451 = sbr.rel (%p449) target = $region52
      $region51: #{tpu_custom_call.1} parent=5 // pred_region
        %s452 = ssub.s32 %s19, 2
        // Predicated region
        $region53: #{tpu_custom_call.1} parent=51 // pred_check
          %p453 = pneg %p142
        $region54: #{tpu_custom_call.1} parent=51 // pred_check_branch
          %455 = sbr.rel (%p453) target = $region56
        $region55: #{tpu_custom_call.1} parent=51 // pred_region
          %s456 = sand.u32 %s127, 1
          %s457 = scalar_lea.sflag [#allocation3], %s456
          %s458 = sand.u32 %s127, 1
          %s459 = scalar_lea.vmem [#allocation5], %s458
          %460 = dma.done %s457, 16
        $region56: #{tpu_custom_call.1} parent=51 // pred_fallthru
          _
        // Predicated region
        $region57: #{tpu_custom_call.1} parent=51 // pred_check
          %p461 = pneg %p168
        $region58: #{tpu_custom_call.1} parent=51 // pred_check_branch
          %463 = sbr.rel (%p461) target = $region60
        $region59: #{tpu_custom_call.1} parent=51 // pred_region
          %s464 = sand.u32 %s153, 1
          %s465 = scalar_lea.sflag [#allocation7], %s464
          %s466 = sand.u32 %s153, 1
          %s467 = scalar_lea.vmem [#allocation6], %s466
          %468 = dma.done %s465, 16
        $region60: #{tpu_custom_call.1} parent=51 // pred_fallthru
          _
      $region52: #{tpu_custom_call.1} parent=5 // pred_fallthru
        _
    $region6: #{tpu_custom_call.1} parent=1 // loop_footer
      %s23 = sadd.s32 1, %s19
    $region7: #{tpu_custom_call.1} parent=1 // loop_footer_branch
      %18 = sbr.rel target = $region3
    $region8: #{tpu_custom_call.1} parent=1 // loop_exit
      _
    %469 = vsyncpa [#allocation3], 1
    %s470 = scalar_lea.sflag [#allocation3], 1
    %471 = vsyncpa %s470, 1
    %472 = vsyncpa [#allocation7], 1
    %s473 = scalar_lea.sflag [#allocation7], 1
    %474 = vsyncpa %s473, 1
    %475 = vsyncpa [#allocation4], 1
    %s476 = scalar_lea.sflag [#allocation4], 1
    %477 = vsyncpa %s476, 1

</llo_original>
